<compile_context>
chip_gen: v5e
topology: v5e:2x2
jax: 0.10.0
libtpu: 0.0.40
codegen_flags: <defaults>
</compile_context>

<pallas_src>
import functools

import jax
import jax.numpy as jnp
from jax.experimental import pallas as pl
from jax.experimental.pallas import tpu as pltpu

LANE = 128  # TPU lane width: last dim of every tile padded to a multiple of this.


# --------------------------------------------------------------------------- helpers
def _round_up(n, m):
    return ((n + m - 1) // m) * m


def _pad2(a, rows, cols):
    r, c = a.shape
    if r == rows and c == cols:
        return a
    return jnp.pad(a, ((0, rows - r), (0, cols - c)))


def _vmem_capacity_bytes():
    """Physical VMEM per TensorCore (64 MiB on v7x, 128 MiB on v5e/v6e)."""
    try:
        return int(pltpu.get_tpu_info().vmem_capacity_bytes)
    except Exception:
        try:
            kind = jax.devices()[0].device_kind.lower()
        except Exception:
            kind = ""
        return (64 if "v7" in kind else 128) * 1024 * 1024


def _num_tensorcores():
    """2 TensorCores per chip on v7x, 1 on v5e/v6e."""
    try:
        kind = jax.devices()[0].device_kind.lower()
    except Exception:
        return 1
    return 2 if "v7" in kind else 1


def _make_resident_factory():
    """BlockSpec factory for VMEM-resident (constant index_map) operands.

    Uses pipeline_mode=pl.Buffered(1) so Pallas does not reserve a second buffer for
    data that never changes across grid steps; falls back to the default (double-
    buffered) spec if the running JAX does not support the kwarg.
    """
    try:
        pl.BlockSpec((8, LANE), lambda i: (0, 0), pipeline_mode=pl.Buffered(1))

        def factory(shape):
            return pl.BlockSpec(shape, lambda i: (0, 0), pipeline_mode=pl.Buffered(1))

        return factory, 1
    except Exception:

        def factory(shape):
            return pl.BlockSpec(shape, lambda i: (0, 0))

        return factory, 2


_resident_spec, _WEIGHT_BUFFERS = _make_resident_factory()


def _pick_batch_tile(batch, dp, d1p, d2p, op_bytes, vmem_cap, n_cores, fuse_mse):
    """Balanced, 16-row-aligned batch tile that fits a conservative VMEM budget."""
    # Resident weights/biases (buffer count depends on whether Buffered(1) is available).
    w_bytes = _WEIGHT_BUFFERS * (
        (dp * d1p + d1p * d2p + d2p * d1p + d1p * dp) * op_bytes
        + (d1p + d2p + d1p + dp) * 4
    )
    out_cols = 1 if fuse_mse else dp
    # Per-row VMEM: double-buffered f32 x tile + double-buffered f32 out tile
    # + f32 intermediate activations + bf16 matmul-operand copies.
    per_row = (2 * dp * 4
               + 2 * out_cols * 4
               + (dp + 2 * d1p + d2p + dp) * 4
               + (dp + d1p + d2p + d1p) * op_bytes)
    budget = int(vmem_cap * 0.55) - w_bytes
    if budget < per_row * 16:
        # TODO(synk): fall back to a weight-tiled schedule (emit_pipeline over K/N weight
        # tiles or per-layer pallas_calls) when the padded weights exceed the VMEM budget
        # (relevant for input_dim >~ 3-4k on v7x's 64 MiB VMEM).
        raise ValueError(
            f"Padded weights ({w_bytes / 2**20:.1f} MiB) leave no room in VMEM "
            f"({vmem_cap / 2**20:.0f} MiB) for the weight-resident schedule; "
            "a weight-tiled schedule is required for this model size on this chip.")
    cap = budget // per_row
    cap = min(cap, 2048 if vmem_cap > (96 << 20) else 1024)
    cap = max(16, (cap // 16) * 16)

    # On v7x force >= 2 grid steps so the 'parallel' batch axis shards across both TCs.
    min_grid = 2 if (n_cores >= 2 and batch > 16) else 1
    grid_b = max(min_grid, -(-batch // cap))
    tb = _round_up(-(-batch // grid_b), 16)      # balanced tiles, bf16 sublane-pack aligned
    while tb > cap and grid_b < batch:
        grid_b += 1
        tb = _round_up(-(-batch // grid_b), 16)
    return int(tb), int(grid_b)


# --------------------------------------------------------------------------- kernels
def _mlp_tile(x_ref, w1_ref, b1_ref, w2_ref, b2_ref, w3_ref, b3_ref, w4_ref, b4_ref):
    """One batch tile: 4 MXU matmuls (bf16 operands, f32 accum) + relu/relu/relu/sigmoid."""
    mm = w1_ref.dtype
    x = x_ref[...].astype(mm)  # in-kernel bf16 cast: free VPU filler under the MXU

    h = jnp.dot(x, w1_ref[...], preferred_element_type=jnp.float32) + b1_ref[...]
    h = jnp.maximum(h, 0.0)
    h = jnp.dot(h.astype(mm), w2_ref[...], preferred_element_type=jnp.float32) + b2_ref[...]
    h = jnp.maximum(h, 0.0)  # encoded
    h = jnp.dot(h.astype(mm), w3_ref[...], preferred_element_type=jnp.float32) + b3_ref[...]
    h = jnp.maximum(h, 0.0)
    h = jnp.dot(h.astype(mm), w4_ref[...], preferred_element_type=jnp.float32) + b4_ref[...]
    return jax.nn.sigmoid(h)  # decoded, f32 (tb, dp)


def _recon_kernel(x_ref, w1_ref, b1_ref, w2_ref, b2_ref, w3_ref, b3_ref, w4_ref, b4_ref,
                  out_ref):
    out_ref[...] = _mlp_tile(x_ref, w1_ref, b1_ref, w2_ref, b2_ref, w3_ref, b3_ref,
                             w4_ref, b4_ref).astype(out_ref.dtype)


def _mse_kernel(d_in, x_ref, w1_ref, b1_ref, w2_ref, b2_ref, w3_ref, b3_ref, w4_ref,
                b4_ref, out_ref):
    """Fused epilogue: per-sample reconstruction MSE (over the valid d_in columns)."""
    recon = _mlp_tile(x_ref, w1_ref, b1_ref, w2_ref, b2_ref, w3_ref, b3_ref, w4_ref, b4_ref)
    err = recon - x_ref[...].astype(jnp.float32)
    tb, dp = err.shape
    # Padded columns reconstruct to sigmoid(0)=0.5 against x=0 -> mask them out.
    col = jax.lax.broadcasted_iota(jnp.int32, (tb, dp), 1)
    err = jnp.where(col < d_in, err, 0.0)
    out_ref[...] = (jnp.sum(err * err, axis=1, keepdims=True)
                    * (1.0 / d_in)).astype(out_ref.dtype)


# --------------------------------------------------------------------------- wrapper
@functools.partial(jax.jit, static_argnames=("d_in", "fuse_mse"))
def _autoencoder_run(x, w1p, b1p, w2p, b2p, w3p, b3p, w4p, b4p, *, d_in, fuse_mse):
    batch = x.shape[0]
    dp, d1p = w1p.shape
    d2p = w2p.shape[1]
    op_bytes = jnp.dtype(w1p.dtype).itemsize

    vmem_cap = _vmem_capacity_bytes()
    tb, grid_b = _pick_batch_tile(batch, dp, d1p, d2p, op_bytes, vmem_cap,
                                  _num_tensorcores(), fuse_mse)
    bp = tb * grid_b

    # x stays f32; pad (rows to bp, lanes to dp) only if needed, in one fused op.
    # Zero-padded columns propagate as exact zeros through matmul+relu; padded rows and
    # the sigmoid(0)=0.5 padded output columns are sliced/masked away.
    x = x.astype(jnp.float32)
    if (bp, dp) != (batch, d_in):
        x = jnp.pad(x, ((0, bp - batch), (0, dp - d_in)))

    out_cols = 1 if fuse_mse else dp
    kernel = functools.partial(_mse_kernel, d_in) if fuse_mse else _recon_kernel

    w_bytes = ((dp * d1p + d1p * d2p + d2p * d1p + d1p * dp) * op_bytes
               + (d1p + d2p + d1p + dp) * 4)
    cost = pl.CostEstimate(
        flops=2 * bp * (dp * d1p + d1p * d2p + d2p * d1p + d1p * dp),
        transcendentals=bp * dp,  # sigmoid exps
        bytes_accessed=bp * dp * 4 + w_bytes + bp * out_cols * 4,
    )

    out = pl.pallas_call(
        kernel,
        out_shape=jax.ShapeDtypeStruct((bp, out_cols), jnp.float32),
        grid=(grid_b,),
        in_specs=[
            pl.BlockSpec((tb, dp), lambda i: (i, 0)),              # x: tiled over batch
            _resident_spec((dp, d1p)), _resident_spec((1, d1p)),   # fc1
            _resident_spec((d1p, d2p)), _resident_spec((1, d2p)),  # fc2
            _resident_spec((d2p, d1p)), _resident_spec((1, d1p)),  # fc3
            _resident_spec((d1p, dp)), _resident_spec((1, dp)),    # fc4
        ],
        out_specs=pl.BlockSpec((tb, out_cols), lambda i: (i, 0)),
        compiler_params=pltpu.CompilerParams(
            dimension_semantics=("parallel",),
            vmem_limit_bytes=int(vmem_cap * 0.75),
        ),
        cost_estimate=cost,
    )(x, w1p, b1p, w2p, b2p, w3p, b3p, w4p, b4p)

    if fuse_mse:
        return out[:batch, 0]
    return out[:batch, :d_in]


def prepare_params(params, matmul_dtype=jnp.bfloat16):
    """Pad weights/biases to lane-dense (128-aligned) shapes and cast once (hoisted)."""
    (w1, b1), (w2, b2), (w3, b3), (w4, b4) = params
    d_in, d1 = w1.shape
    d2 = w2.shape[1]
    dp, d1p, d2p = _round_up(d_in, LANE), _round_up(d1, LANE), _round_up(d2, LANE)
    arrays = (
        _pad2(w1, dp, d1p).astype(matmul_dtype), _pad2(b1, 1, d1p).astype(jnp.float32),
        _pad2(w2, d1p, d2p).astype(matmul_dtype), _pad2(b2, 1, d2p).astype(jnp.float32),
        _pad2(w3, d2p, d1p).astype(matmul_dtype), _pad2(b3, 1, d1p).astype(jnp.float32),
        _pad2(w4, d1p, dp).astype(matmul_dtype), _pad2(b4, 1, dp).astype(jnp.float32),
    )
    return {"arrays": arrays, "d_in": int(d_in)}


def _as_prepared(params_or_prepared, matmul_dtype):
    if isinstance(params_or_prepared, dict) and "arrays" in params_or_prepared:
        return params_or_prepared
    return prepare_params(params_or_prepared, matmul_dtype)


def my_autoencoder_forward(x, params, matmul_dtype=jnp.bfloat16):
    """Fused autoencoder forward. x: (B, input_dim) float32 -> (B, input_dim) float32."""
    prepared = _as_prepared(params, matmul_dtype)
    return _autoencoder_run(x, *prepared["arrays"], d_in=prepared["d_in"], fuse_mse=False)


def decision_function(x, params, matmul_dtype=jnp.bfloat16):
    """Anomaly scores = -MSE reconstruction error per sample (MSE fused into the kernel)."""
    prepared = _as_prepared(params, matmul_dtype)
    mse = _autoencoder_run(x, *prepared["arrays"], d_in=prepared["d_in"], fuse_mse=True)
    return -mse


# --------------------------------------------------------------------------- reference
def init_params(key, input_dim):
    """Mirror nn.Linear default init (uniform +/- 1/sqrt(fan_in)).

    Weights stored pre-transposed as (in_dim, out_dim); biases as (1, out_dim).
    """
    inter1 = int(0.67 * input_dim)
    inter2 = int(0.33 * input_dim)
    dims = [(input_dim, inter1), (inter1, inter2), (inter2, inter1), (inter1, input_dim)]
    params = []
    for (d_in, d_out) in dims:
        key, kw, kb = jax.random.split(key, 3)
        bound = 1.0 / jnp.sqrt(jnp.float32(d_in))
        w = jax.random.uniform(kw, (d_in, d_out), jnp.float32, -bound, bound)
        b = jax.random.uniform(kb, (1, d_out), jnp.float32, -bound, bound)
        params.append((w, b))
    return params


def reference_forward(x, params, matmul_dtype=jnp.float32):
    """Pure-JAX reference; matmul_dtype lets us match the kernel's bf16 operand casts."""
    def layer(h, w, b):
        return jnp.dot(h.astype(matmul_dtype), w.astype(matmul_dtype),
                       preferred_element_type=jnp.float32) + b
    (w1, b1), (w2, b2), (w3, b3), (w4, b4) = params
    h = jax.nn.relu(layer(x, w1, b1))
    h = jax.nn.relu(layer(h, w2, b2))
    h = jax.nn.relu(layer(h, w3, b3))
    return jax.nn.sigmoid(layer(h, w4, b4))


if __name__ == "__main__":
    key = jax.random.PRNGKey(0)
    kx, kp = jax.random.split(key)

    batch, input_dim = 8, 32  # inter1 = 21, inter2 = 10
    x = jax.random.normal(kx, (batch, input_dim), jnp.float32)
    params = init_params(kp, input_dim)
    prepared = prepare_params(params)  # pad + bf16 cast once, reused by both calls

    decoded = jax.block_until_ready(my_autoencoder_forward(x, prepared))
    assert decoded.shape == (batch, input_dim)

    # Tight check vs a reference using the same bf16 operand casts,
    # loose check vs the full-f32 reference (bf16 matmul precision).
    ref_bf16 = reference_forward(x, params, matmul_dtype=jnp.bfloat16)
    ref_f32 = reference_forward(x, params, matmul_dtype=jnp.float32)
    assert jnp.allclose(decoded, ref_bf16, atol=1e-4, rtol=1e-4), "mismatch vs bf16 reference"
    assert jnp.allclose(decoded, ref_f32, atol=5e-2, rtol=5e-2), "mismatch vs f32 reference"

    # Fused-MSE anomaly-score path (no full reconstruction writeback).
    scores = jax.block_until_ready(decision_function(x, prepared))
    assert scores.shape == (batch,)
    ref_scores = -jnp.mean((ref_bf16 - x) ** 2, axis=1)
    assert jnp.allclose(scores, ref_scores, atol=1e-4, rtol=1e-4), "mismatch vs MSE reference"

    print("KERNEL_OK")
</pallas_src>

<mosaic_0001>
module attributes {stable_mosaic.version = 11 : i64} {
  func.func @_recon_kernel(%arg0: i32, %arg1: memref<16x128xf32, #tpu.memory_space<vmem>>, %arg2: memref<128x128xbf16, #tpu.memory_space<vmem>>, %arg3: memref<1x128xf32, #tpu.memory_space<vmem>>, %arg4: memref<128x128xbf16, #tpu.memory_space<vmem>>, %arg5: memref<1x128xf32, #tpu.memory_space<vmem>>, %arg6: memref<128x128xbf16, #tpu.memory_space<vmem>>, %arg7: memref<1x128xf32, #tpu.memory_space<vmem>>, %arg8: memref<128x128xbf16, #tpu.memory_space<vmem>>, %arg9: memref<1x128xf32, #tpu.memory_space<vmem>>, %arg10: memref<16x128xf32, #tpu.memory_space<vmem>>) attributes {dimension_semantics = [#tpu.dimension_semantics<parallel>], iteration_bounds = array<i64: 1>, scalar_prefetch = 0 : i64, scratch_operands = 0 : i64, tpu.core_type = #tpu.core_type<tc>, window_params = [{transform_indices = @transform_0, window_bounds = array<i64: 16, 128>}, {pipeline_mode = #tpu.pipeline_mode<synchronous>, transform_indices = @transform_1, window_bounds = array<i64: 128, 128>}, {pipeline_mode = #tpu.pipeline_mode<synchronous>, transform_indices = @transform_2, window_bounds = array<i64: 1, 128>}, {pipeline_mode = #tpu.pipeline_mode<synchronous>, transform_indices = @transform_3, window_bounds = array<i64: 128, 128>}, {pipeline_mode = #tpu.pipeline_mode<synchronous>, transform_indices = @transform_4, window_bounds = array<i64: 1, 128>}, {pipeline_mode = #tpu.pipeline_mode<synchronous>, transform_indices = @transform_5, window_bounds = array<i64: 128, 128>}, {pipeline_mode = #tpu.pipeline_mode<synchronous>, transform_indices = @transform_6, window_bounds = array<i64: 1, 128>}, {pipeline_mode = #tpu.pipeline_mode<synchronous>, transform_indices = @transform_7, window_bounds = array<i64: 128, 128>}, {pipeline_mode = #tpu.pipeline_mode<synchronous>, transform_indices = @transform_8, window_bounds = array<i64: 1, 128>}, {transform_indices = @transform_9, window_bounds = array<i64: 16, 128>}]} {
    %c0 = arith.constant 0 : index
    %c0_0 = arith.constant 0 : index
    %0 = vector.load %arg1[%c0, %c0_0] : memref<16x128xf32, #tpu.memory_space<vmem>>, vector<16x128xf32>
    %1 = arith.truncf %0 : vector<16x128xf32> to vector<16x128xbf16>
    %c0_1 = arith.constant 0 : index
    %c0_2 = arith.constant 0 : index
    %2 = vector.load %arg2[%c0_1, %c0_2] : memref<128x128xbf16, #tpu.memory_space<vmem>>, vector<128x128xbf16>
    %cst = arith.constant dense<0.000000e+00> : vector<16x128xf32>
    %3 = tpu.matmul %1, %2, %cst {dimension_numbers = #tpu.dot_dimension_numbers<[1], [0], [0], [1], [0, 0, 1, 1], [], []>} : vector<16x128xbf16>, vector<128x128xbf16>, vector<16x128xf32> -> vector<16x128xf32>
    %c0_3 = arith.constant 0 : index
    %c0_4 = arith.constant 0 : index
    %4 = vector.load %arg3[%c0_3, %c0_4] : memref<1x128xf32, #tpu.memory_space<vmem>>, vector<1x128xf32>
    %5 = vector.broadcast %4 : vector<1x128xf32> to vector<16x128xf32>
    %6 = arith.addf %3, %5 : vector<16x128xf32>
    %cst_5 = arith.constant 0.000000e+00 : f32
    %7 = vector.broadcast %cst_5 : f32 to vector<16x128xf32>
    %8 = arith.maximumf %6, %7 : vector<16x128xf32>
    %9 = arith.truncf %8 : vector<16x128xf32> to vector<16x128xbf16>
    %c0_6 = arith.constant 0 : index
    %c0_7 = arith.constant 0 : index
    %10 = vector.load %arg4[%c0_6, %c0_7] : memref<128x128xbf16, #tpu.memory_space<vmem>>, vector<128x128xbf16>
    %cst_8 = arith.constant dense<0.000000e+00> : vector<16x128xf32>
    %11 = tpu.matmul %9, %10, %cst_8 {dimension_numbers = #tpu.dot_dimension_numbers<[1], [0], [0], [1], [0, 0, 1, 1], [], []>} : vector<16x128xbf16>, vector<128x128xbf16>, vector<16x128xf32> -> vector<16x128xf32>
    %c0_9 = arith.constant 0 : index
    %c0_10 = arith.constant 0 : index
    %12 = vector.load %arg5[%c0_9, %c0_10] : memref<1x128xf32, #tpu.memory_space<vmem>>, vector<1x128xf32>
    %13 = vector.broadcast %12 : vector<1x128xf32> to vector<16x128xf32>
    %14 = arith.addf %11, %13 : vector<16x128xf32>
    %cst_11 = arith.constant 0.000000e+00 : f32
    %15 = vector.broadcast %cst_11 : f32 to vector<16x128xf32>
    %16 = arith.maximumf %14, %15 : vector<16x128xf32>
    %17 = arith.truncf %16 : vector<16x128xf32> to vector<16x128xbf16>
    %c0_12 = arith.constant 0 : index
    %c0_13 = arith.constant 0 : index
    %18 = vector.load %arg6[%c0_12, %c0_13] : memref<128x128xbf16, #tpu.memory_space<vmem>>, vector<128x128xbf16>
    %cst_14 = arith.constant dense<0.000000e+00> : vector<16x128xf32>
    %19 = tpu.matmul %17, %18, %cst_14 {dimension_numbers = #tpu.dot_dimension_numbers<[1], [0], [0], [1], [0, 0, 1, 1], [], []>} : vector<16x128xbf16>, vector<128x128xbf16>, vector<16x128xf32> -> vector<16x128xf32>
    %c0_15 = arith.constant 0 : index
    %c0_16 = arith.constant 0 : index
    %20 = vector.load %arg7[%c0_15, %c0_16] : memref<1x128xf32, #tpu.memory_space<vmem>>, vector<1x128xf32>
    %21 = vector.broadcast %20 : vector<1x128xf32> to vector<16x128xf32>
    %22 = arith.addf %19, %21 : vector<16x128xf32>
    %cst_17 = arith.constant 0.000000e+00 : f32
    %23 = vector.broadcast %cst_17 : f32 to vector<16x128xf32>
    %24 = arith.maximumf %22, %23 : vector<16x128xf32>
    %25 = arith.truncf %24 : vector<16x128xf32> to vector<16x128xbf16>
    %c0_18 = arith.constant 0 : index
    %c0_19 = arith.constant 0 : index
    %26 = vector.load %arg8[%c0_18, %c0_19] : memref<128x128xbf16, #tpu.memory_space<vmem>>, vector<128x128xbf16>
    %cst_20 = arith.constant dense<0.000000e+00> : vector<16x128xf32>
    %27 = tpu.matmul %25, %26, %cst_20 {dimension_numbers = #tpu.dot_dimension_numbers<[1], [0], [0], [1], [0, 0, 1, 1], [], []>} : vector<16x128xbf16>, vector<128x128xbf16>, vector<16x128xf32> -> vector<16x128xf32>
    %c0_21 = arith.constant 0 : index
    %c0_22 = arith.constant 0 : index
    %28 = vector.load %arg9[%c0_21, %c0_22] : memref<1x128xf32, #tpu.memory_space<vmem>>, vector<1x128xf32>
    %29 = vector.broadcast %28 : vector<1x128xf32> to vector<16x128xf32>
    %30 = arith.addf %27, %29 : vector<16x128xf32>
    %31 = arith.negf %30 : vector<16x128xf32>
    %32 = math.exp %31 : vector<16x128xf32>
    %cst_23 = arith.constant 1.000000e+00 : f32
    %33 = vector.broadcast %cst_23 : f32 to vector<16x128xf32>
    %34 = arith.addf %33, %32 : vector<16x128xf32>
    %35 = arith.divf %33, %34 : vector<16x128xf32>
    %c0_24 = arith.constant 0 : index
    %c0_25 = arith.constant 0 : index
    %36 = vector.load %arg10[%c0_24, %c0_25] : memref<16x128xf32, #tpu.memory_space<vmem>>, vector<16x128xf32>
    tpu.vector_store %arg10[%c0_24, %c0_25], %35 {strides = array<i32>} : memref<16x128xf32, #tpu.memory_space<vmem>>, vector<16x128xf32>,
    return
  }
  func.func @transform_0(%arg0: i32) -> (i32, i32) {
    %c0_i32 = arith.constant 0 : i32
    %c0_i32_0 = arith.constant 0 : i32
    return %arg0, %c0_i32 : i32, i32
  }
  func.func @transform_1(%arg0: i32) -> (i32, i32) {
    %c0_i32 = arith.constant 0 : i32
    %c0_i32_0 = arith.constant 0 : i32
    %c0_i32_1 = arith.constant 0 : i32
    return %c0_i32, %c0_i32_0 : i32, i32
  }
  func.func @transform_2(%arg0: i32) -> (i32, i32) {
    %c0_i32 = arith.constant 0 : i32
    %c0_i32_0 = arith.constant 0 : i32
    %c0_i32_1 = arith.constant 0 : i32
    return %c0_i32, %c0_i32_0 : i32, i32
  }
  func.func @transform_3(%arg0: i32) -> (i32, i32) {
    %c0_i32 = arith.constant 0 : i32
    %c0_i32_0 = arith.constant 0 : i32
    %c0_i32_1 = arith.constant 0 : i32
    return %c0_i32, %c0_i32_0 : i32, i32
  }
  func.func @transform_4(%arg0: i32) -> (i32, i32) {
    %c0_i32 = arith.constant 0 : i32
    %c0_i32_0 = arith.constant 0 : i32
    %c0_i32_1 = arith.constant 0 : i32
    return %c0_i32, %c0_i32_0 : i32, i32
  }
  func.func @transform_5(%arg0: i32) -> (i32, i32) {
    %c0_i32 = arith.constant 0 : i32
    %c0_i32_0 = arith.constant 0 : i32
    %c0_i32_1 = arith.constant 0 : i32
    return %c0_i32, %c0_i32_0 : i32, i32
  }
  func.func @transform_6(%arg0: i32) -> (i32, i32) {
    %c0_i32 = arith.constant 0 : i32
    %c0_i32_0 = arith.constant 0 : i32
    %c0_i32_1 = arith.constant 0 : i32
    return %c0_i32, %c0_i32_0 : i32, i32
  }
  func.func @transform_7(%arg0: i32) -> (i32, i32) {
    %c0_i32 = arith.constant 0 : i32
    %c0_i32_0 = arith.constant 0 : i32
    %c0_i32_1 = arith.constant 0 : i32
    return %c0_i32, %c0_i32_0 : i32, i32
  }
  func.func @transform_8(%arg0: i32) -> (i32, i32) {
    %c0_i32 = arith.constant 0 : i32
    %c0_i32_0 = arith.constant 0 : i32
    %c0_i32_1 = arith.constant 0 : i32
    return %c0_i32, %c0_i32_0 : i32, i32
  }
  func.func @transform_9(%arg0: i32) -> (i32, i32) {
    %c0_i32 = arith.constant 0 : i32
    %c0_i32_0 = arith.constant 0 : i32
    return %arg0, %c0_i32 : i32, i32
  }
}

</mosaic_0001>

<llo_original>
// kernel: _autoencoder_run.1
$region0: #{_autoencoder_run.1}
  #allocation0 [shape = 'u32[]', space=smem, size = 0x4, offset = 0x4, fixed_abs, tag = 'smem constant byte address 0x4 - core index']
  #allocation1 [shape = 'u32[72,128]{1,0:T(1,128)}', space=vmem, size = 0x9000, scoped, tag = 'internal scratch']
  %s0 = inlined_call_operand.vmem [shape: f32[16,128], index: 0, kind: input, shape index: {}]
  %s1 = inlined_call_operand.hbm [shape: bf16[128,128], index: 1, kind: input, shape index: {}]
  %s2 = inlined_call_operand.vmem [shape: f32[1,128], index: 2, kind: input, shape index: {}]
  %s3 = inlined_call_operand.hbm [shape: bf16[128,128], index: 3, kind: input, shape index: {}]
  %s4 = inlined_call_operand.vmem [shape: f32[1,128], index: 4, kind: input, shape index: {}]
  %s5 = inlined_call_operand.hbm [shape: bf16[128,128], index: 5, kind: input, shape index: {}]
  %s6 = inlined_call_operand.vmem [shape: f32[1,128], index: 6, kind: input, shape index: {}]
  %s7 = inlined_call_operand.hbm [shape: bf16[128,128], index: 7, kind: input, shape index: {}]
  %s8 = inlined_call_operand.vmem [shape: f32[1,128], index: 8, kind: input, shape index: {}]
  %s9 = inlined_call_operand.vmem [shape: f32[16,128], index: 9, kind: output, shape index: {}]
  %s10 = sld [smem:[#allocation0]]
  $region62: #{_autoencoder_run.1} parent=0
    _
  %s12 = ssub.s32 1, %s10
  %s13 = scalar_select 0, %s12, %s10
  $region1: #{_autoencoder_run.1} parent=0
    #allocation2 [shape = 'u8[32768]{0}', space=vmem, size = 0x8000, scoped, tag = 'input window, operand 1, single buffered']
    #allocation3 [shape = 's32[1]{0}', space=sflag, size = 0x4, scoped, tag = 'scoped memory for _autoencoder_run.1']
    #allocation4 [shape = 'u8[32768]{0}', space=vmem, size = 0x8000, scoped, tag = 'input window, operand 3, single buffered']
    #allocation5 [shape = 's32[1]{0}', space=sflag, size = 0x4, scoped, tag = 'scoped memory for _autoencoder_run.1']
    #allocation6 [shape = 'u8[32768]{0}', space=vmem, size = 0x8000, scoped, tag = 'input window, operand 5, single buffered']
    #allocation7 [shape = 'u8[32768]{0}', space=vmem, size = 0x8000, scoped, tag = 'input window, operand 7, single buffered']
    #allocation8 [shape = 's32[1]{0}', space=sflag, size = 0x4, scoped, tag = 'scoped memory for _autoencoder_run.1']
    %14 = vsyncpa [#allocation3], 0
    %15 = vsyncpa [#allocation5], 0
    %16 = vsyncpa [#allocation8], 0
    // Predicated region
    $region2: #{_autoencoder_run.1} parent=1 // pred_check
      _
    $region3: #{_autoencoder_run.1} parent=1 // pred_check_branch
      %18 = sbr.rel (0) target = $region5
    $region4: #{_autoencoder_run.1} parent=1 // pred_region
      _
    $region5: #{_autoencoder_run.1} parent=1 // pred_fallthru
      _
    // Predicated region
    $region6: #{_autoencoder_run.1} parent=1 // pred_check
      _
    $region7: #{_autoencoder_run.1} parent=1 // pred_check_branch
      %20 = sbr.rel (0) target = $region9
    $region8: #{_autoencoder_run.1} parent=1 // pred_region
      %22 = vsyncadd [#allocation3], 0
      %s23 = sshll.u32 %s1, 4
      %s24 = int_to_ptr.hbm [resolvable:$true] %s23
      %s25 = sshll.u32 [#allocation2], 4
      %s26 = int_to_ptr.vmem [resolvable:$true] %s25
      %31 = dma.hbm_to_vmem [thread:$0]  %s24, 1024, %s26, [#allocation3], 64, 64, 4
    $region9: #{_autoencoder_run.1} parent=1 // pred_fallthru
      _
    // Predicated region
    $region10: #{_autoencoder_run.1} parent=1 // pred_check
      _
    $region11: #{_autoencoder_run.1} parent=1 // pred_check_branch
      %33 = sbr.rel (0) target = $region13
    $region12: #{_autoencoder_run.1} parent=1 // pred_region
      _
    $region13: #{_autoencoder_run.1} parent=1 // pred_fallthru
      _
    // Predicated region
    $region14: #{_autoencoder_run.1} parent=1 // pred_check
      _
    $region15: #{_autoencoder_run.1} parent=1 // pred_check_branch
      %35 = sbr.rel (0) target = $region17
    $region16: #{_autoencoder_run.1} parent=1 // pred_region
      %37 = vsyncadd [#allocation5], 0
      %s38 = sshll.u32 %s3, 4
      %s39 = int_to_ptr.hbm [resolvable:$true] %s38
      %s40 = sshll.u32 [#allocation4], 4
      %s41 = int_to_ptr.vmem [resolvable:$true] %s40
      %46 = dma.hbm_to_vmem [thread:$0]  %s39, 1024, %s41, [#allocation5], 64, 64, 4
    $region17: #{_autoencoder_run.1} parent=1 // pred_fallthru
      _
    // Predicated region
    $region18: #{_autoencoder_run.1} parent=1 // pred_check
      _
    $region19: #{_autoencoder_run.1} parent=1 // pred_check_branch
      %48 = sbr.rel (0) target = $region21
    $region20: #{_autoencoder_run.1} parent=1 // pred_region
      _
    $region21: #{_autoencoder_run.1} parent=1 // pred_fallthru
      _
    // Predicated region
    $region22: #{_autoencoder_run.1} parent=1 // pred_check
      _
    $region23: #{_autoencoder_run.1} parent=1 // pred_check_branch
      %50 = sbr.rel (0) target = $region25
    $region24: #{_autoencoder_run.1} parent=1 // pred_region
      %52 = vsyncadd [#allocation5], 0
      %s53 = sshll.u32 %s5, 4
      %s54 = int_to_ptr.hbm [resolvable:$true] %s53
      %s55 = sshll.u32 [#allocation6], 4
      %s56 = int_to_ptr.vmem [resolvable:$true] %s55
      %61 = dma.hbm_to_vmem [thread:$0]  %s54, 1024, %s56, [#allocation5], 64, 64, 4
    $region25: #{_autoencoder_run.1} parent=1 // pred_fallthru
      _
    // Predicated region
    $region26: #{_autoencoder_run.1} parent=1 // pred_check
      _
    $region27: #{_autoencoder_run.1} parent=1 // pred_check_branch
      %63 = sbr.rel (0) target = $region29
    $region28: #{_autoencoder_run.1} parent=1 // pred_region
      _
    $region29: #{_autoencoder_run.1} parent=1 // pred_fallthru
      _
    // Predicated region
    $region30: #{_autoencoder_run.1} parent=1 // pred_check
      _
    $region31: #{_autoencoder_run.1} parent=1 // pred_check_branch
      %65 = sbr.rel (0) target = $region33
    $region32: #{_autoencoder_run.1} parent=1 // pred_region
      %67 = vsyncadd [#allocation8], 0
      %s68 = sshll.u32 %s7, 4
      %s69 = int_to_ptr.hbm [resolvable:$true] %s68
      %s70 = sshll.u32 [#allocation7], 4
      %s71 = int_to_ptr.vmem [resolvable:$true] %s70
      %76 = dma.hbm_to_vmem [thread:$0]  %s69, 1024, %s71, [#allocation8], 64, 64, 4
    $region33: #{_autoencoder_run.1} parent=1 // pred_fallthru
      _
    // Predicated region
    $region34: #{_autoencoder_run.1} parent=1 // pred_check
      _
    $region35: #{_autoencoder_run.1} parent=1 // pred_check_branch
      %78 = sbr.rel (0) target = $region37
    $region36: #{_autoencoder_run.1} parent=1 // pred_region
      _
    $region37: #{_autoencoder_run.1} parent=1 // pred_fallthru
      _
    // Predicated region
    $region38: #{_autoencoder_run.1} parent=1 // pred_check
      _
    $region39: #{_autoencoder_run.1} parent=1 // pred_check_branch
      %80 = sbr.rel (0) target = $region41
    $region40: #{_autoencoder_run.1} parent=1 // pred_region
      %82 = dma.done [#allocation3], 1024
    $region41: #{_autoencoder_run.1} parent=1 // pred_fallthru
      _
    // Predicated region
    $region42: #{_autoencoder_run.1} parent=1 // pred_check
      _
    $region43: #{_autoencoder_run.1} parent=1 // pred_check_branch
      %84 = sbr.rel (0) target = $region45
    $region44: #{_autoencoder_run.1} parent=1 // pred_region
      %86 = dma.done [#allocation5], 1024
    $region45: #{_autoencoder_run.1} parent=1 // pred_fallthru
      _
    // Predicated region
    $region46: #{_autoencoder_run.1} parent=1 // pred_check
      _
    $region47: #{_autoencoder_run.1} parent=1 // pred_check_branch
      %88 = sbr.rel (0) target = $region49
    $region48: #{_autoencoder_run.1} parent=1 // pred_region
      %90 = dma.done [#allocation5], 1024
    $region49: #{_autoencoder_run.1} parent=1 // pred_fallthru
      _
    // Predicated region
    $region50: #{_autoencoder_run.1} parent=1 // pred_check
      _
    $region51: #{_autoencoder_run.1} parent=1 // pred_check_branch
      %92 = sbr.rel (0) target = $region53
    $region52: #{_autoencoder_run.1} parent=1 // pred_region
      %94 = dma.done [#allocation8], 1024
    $region53: #{_autoencoder_run.1} parent=1 // pred_fallthru
      _
    %v95 = vld [vmem:[%s0] sm:$0xff]
    %v96 = vld [vmem:[%s0 + $0x8] sm:$0xff]
    %v97 = vpack.c.bf16 %v96, %v95
    %v98 = vld [vmem:[#allocation2] sm:$0xf]
    %v99 = vld [vmem:[#allocation2 + $0x4] sm:$0xf]
    %v100 = vld [vmem:[#allocation2 + $0x8] sm:$0xf]
    %v101 = vld [vmem:[#allocation2 + $0xc] sm:$0xf]
    %v102 = vld [vmem:[#allocation2 + $0x10] sm:$0xf]
    %v103 = vld [vmem:[#allocation2 + $0x14] sm:$0xf]
    %v104 = vld [vmem:[#allocation2 + $0x18] sm:$0xf]
    %v105 = vld [vmem:[#allocation2 + $0x1c] sm:$0xf]
    %v106 = vld [vmem:[#allocation2 + $0x20] sm:$0xf]
    %v107 = vld [vmem:[#allocation2 + $0x24] sm:$0xf]
    %v108 = vld [vmem:[#allocation2 + $0x28] sm:$0xf]
    %v109 = vld [vmem:[#allocation2 + $0x2c] sm:$0xf]
    %v110 = vld [vmem:[#allocation2 + $0x30] sm:$0xf]
    %v111 = vld [vmem:[#allocation2 + $0x34] sm:$0xf]
    %v112 = vld [vmem:[#allocation2 + $0x38] sm:$0xf]
    %v113 = vld [vmem:[#allocation2 + $0x3c] sm:$0xf]
    %v114 = vld [vmem:[%s2] sm:$0x1]
    %v116 = vperm.slane %v114, 0
    %v134 = vunpack.c.l.b16 %v98
    %v135 = vunpack.c.l.b16 %v99
    %v136 = vunpack.c.l.b16 %v100
    %v137 = vunpack.c.l.b16 %v101
    %v138 = vunpack.c.l.b16 %v102
    %v139 = vunpack.c.l.b16 %v103
    %v140 = vunpack.c.l.b16 %v104
    %v141 = vunpack.c.l.b16 %v105
    %v142 = vunpack.c.l.b16 %v106
    %v143 = vunpack.c.l.b16 %v107
    %v144 = vunpack.c.l.b16 %v108
    %v145 = vunpack.c.l.b16 %v109
    %v146 = vunpack.c.l.b16 %v110
    %v147 = vunpack.c.l.b16 %v111
    %v148 = vunpack.c.l.b16 %v112
    %v149 = vunpack.c.l.b16 %v113
    %v150 = vpack.c.b16 %v135, %v134
    %v151 = vpack.c.b16 %v137, %v136
    %v152 = vpack.c.b16 %v139, %v138
    %v153 = vpack.c.b16 %v141, %v140
    %v154 = vpack.c.b16 %v143, %v142
    %v155 = vpack.c.b16 %v145, %v144
    %v156 = vpack.c.b16 %v147, %v146
    %v157 = vpack.c.b16 %v149, %v148
    %166 = vmatpush.bf16.msra.mxu0 %v157
    %167 = vmatpush.bf16.msra.mxu0 %v156
    %168 = vmatpush.bf16.msra.mxu0 %v155
    %169 = vmatpush.bf16.msra.mxu0 %v154
    %170 = vmatpush.bf16.msra.mxu0 %v153
    %171 = vmatpush.bf16.msra.mxu0 %v152
    %172 = vmatpush.bf16.msra.mxu0 %v151
    %173 = vmatpush.bf16.msra.mxu0 %v150
    %174 = vmatmul.bf16.gmra.mxu0 %v97
    %v175 = vpop.f32.mrf.mxu0
    %v176 = vadd.f32 %v116, %v175
    %v177 = vpop.f32.mrf.mxu0
    %v178 = vadd.f32 %v116, %v177
    %179 = vdwg.mxu0
    %v180 = vmax.f32 %v176, 0.0
    %v181 = vmax.f32 %v178, 0.0
    %v182 = vpack.c.bf16 %v181, %v180
    %v183 = vld [vmem:[#allocation4] sm:$0xf]
    %v184 = vld [vmem:[#allocation4 + $0x4] sm:$0xf]
    %v185 = vld [vmem:[#allocation4 + $0x8] sm:$0xf]
    %v186 = vld [vmem:[#allocation4 + $0xc] sm:$0xf]
    %v187 = vld [vmem:[#allocation4 + $0x10] sm:$0xf]
    %v188 = vld [vmem:[#allocation4 + $0x14] sm:$0xf]
    %v189 = vld [vmem:[#allocation4 + $0x18] sm:$0xf]
    %v190 = vld [vmem:[#allocation4 + $0x1c] sm:$0xf]
    %v191 = vld [vmem:[#allocation4 + $0x20] sm:$0xf]
    %v192 = vld [vmem:[#allocation4 + $0x24] sm:$0xf]
    %v193 = vld [vmem:[#allocation4 + $0x28] sm:$0xf]
    %v194 = vld [vmem:[#allocation4 + $0x2c] sm:$0xf]
    %v195 = vld [vmem:[#allocation4 + $0x30] sm:$0xf]
    %v196 = vld [vmem:[#allocation4 + $0x34] sm:$0xf]
    %v197 = vld [vmem:[#allocation4 + $0x38] sm:$0xf]
    %v198 = vld [vmem:[#allocation4 + $0x3c] sm:$0xf]
    %v199 = vld [vmem:[%s4] sm:$0x1]
    %v201 = vperm.slane %v199, 0
    %v219 = vunpack.c.l.b16 %v183
    %v220 = vunpack.c.l.b16 %v184
    %v221 = vunpack.c.l.b16 %v185
    %v222 = vunpack.c.l.b16 %v186
    %v223 = vunpack.c.l.b16 %v187
    %v224 = vunpack.c.l.b16 %v188
    %v225 = vunpack.c.l.b16 %v189
    %v226 = vunpack.c.l.b16 %v190
    %v227 = vunpack.c.l.b16 %v191
    %v228 = vunpack.c.l.b16 %v192
    %v229 = vunpack.c.l.b16 %v193
    %v230 = vunpack.c.l.b16 %v194
    %v231 = vunpack.c.l.b16 %v195
    %v232 = vunpack.c.l.b16 %v196
    %v233 = vunpack.c.l.b16 %v197
    %v234 = vunpack.c.l.b16 %v198
    %v235 = vpack.c.b16 %v220, %v219
    %v236 = vpack.c.b16 %v222, %v221
    %v237 = vpack.c.b16 %v224, %v223
    %v238 = vpack.c.b16 %v226, %v225
    %v239 = vpack.c.b16 %v228, %v227
    %v240 = vpack.c.b16 %v230, %v229
    %v241 = vpack.c.b16 %v232, %v231
    %v242 = vpack.c.b16 %v234, %v233
    %251 = vmatpush.bf16.msra.mxu0 %v242
    %252 = vmatpush.bf16.msra.mxu0 %v241
    %253 = vmatpush.bf16.msra.mxu0 %v240
    %254 = vmatpush.bf16.msra.mxu0 %v239
    %255 = vmatpush.bf16.msra.mxu0 %v238
    %256 = vmatpush.bf16.msra.mxu0 %v237
    %257 = vmatpush.bf16.msra.mxu0 %v236
    %258 = vmatpush.bf16.msra.mxu0 %v235
    %259 = vmatmul.bf16.gmra.mxu0 %v182
    %v260 = vpop.f32.mrf.mxu0
    %v261 = vadd.f32 %v201, %v260
    %v262 = vpop.f32.mrf.mxu0
    %v263 = vadd.f32 %v201, %v262
    %264 = vdwg.mxu0
    %v265 = vmax.f32 %v261, 0.0
    %v266 = vmax.f32 %v263, 0.0
    %v267 = vpack.c.bf16 %v266, %v265
    %v268 = vld [vmem:[#allocation6] sm:$0xf]
    %v269 = vld [vmem:[#allocation6 + $0x4] sm:$0xf]
    %v270 = vld [vmem:[#allocation6 + $0x8] sm:$0xf]
    %v271 = vld [vmem:[#allocation6 + $0xc] sm:$0xf]
    %v272 = vld [vmem:[#allocation6 + $0x10] sm:$0xf]
    %v273 = vld [vmem:[#allocation6 + $0x14] sm:$0xf]
    %v274 = vld [vmem:[#allocation6 + $0x18] sm:$0xf]
    %v275 = vld [vmem:[#allocation6 + $0x1c] sm:$0xf]
    %v276 = vld [vmem:[#allocation6 + $0x20] sm:$0xf]
    %v277 = vld [vmem:[#allocation6 + $0x24] sm:$0xf]
    %v278 = vld [vmem:[#allocation6 + $0x28] sm:$0xf]
    %v279 = vld [vmem:[#allocation6 + $0x2c] sm:$0xf]
    %v280 = vld [vmem:[#allocation6 + $0x30] sm:$0xf]
    %v281 = vld [vmem:[#allocation6 + $0x34] sm:$0xf]
    %v282 = vld [vmem:[#allocation6 + $0x38] sm:$0xf]
    %v283 = vld [vmem:[#allocation6 + $0x3c] sm:$0xf]
    %v284 = vld [vmem:[%s6] sm:$0x1]
    %v286 = vperm.slane %v284, 0
    %v304 = vunpack.c.l.b16 %v268
    %v305 = vunpack.c.l.b16 %v269
    %v306 = vunpack.c.l.b16 %v270
    %v307 = vunpack.c.l.b16 %v271
    %v308 = vunpack.c.l.b16 %v272
    %v309 = vunpack.c.l.b16 %v273
    %v310 = vunpack.c.l.b16 %v274
    %v311 = vunpack.c.l.b16 %v275
    %v312 = vunpack.c.l.b16 %v276
    %v313 = vunpack.c.l.b16 %v277
    %v314 = vunpack.c.l.b16 %v278
    %v315 = vunpack.c.l.b16 %v279
    %v316 = vunpack.c.l.b16 %v280
    %v317 = vunpack.c.l.b16 %v281
    %v318 = vunpack.c.l.b16 %v282
    %v319 = vunpack.c.l.b16 %v283
    %v320 = vpack.c.b16 %v305, %v304
    %v321 = vpack.c.b16 %v307, %v306
    %v322 = vpack.c.b16 %v309, %v308
    %v323 = vpack.c.b16 %v311, %v310
    %v324 = vpack.c.b16 %v313, %v312
    %v325 = vpack.c.b16 %v315, %v314
    %v326 = vpack.c.b16 %v317, %v316
    %v327 = vpack.c.b16 %v319, %v318
    %336 = vmatpush.bf16.msra.mxu0 %v327
    %337 = vmatpush.bf16.msra.mxu0 %v326
    %338 = vmatpush.bf16.msra.mxu0 %v325
    %339 = vmatpush.bf16.msra.mxu0 %v324
    %340 = vmatpush.bf16.msra.mxu0 %v323
    %341 = vmatpush.bf16.msra.mxu0 %v322
    %342 = vmatpush.bf16.msra.mxu0 %v321
    %343 = vmatpush.bf16.msra.mxu0 %v320
    %344 = vmatmul.bf16.gmra.mxu0 %v267
    %v345 = vpop.f32.mrf.mxu0
    %v346 = vadd.f32 %v286, %v345
    %v347 = vpop.f32.mrf.mxu0
    %v348 = vadd.f32 %v286, %v347
    %349 = vdwg.mxu0
    %v350 = vmax.f32 %v346, 0.0
    %v351 = vmax.f32 %v348, 0.0
    %v352 = vpack.c.bf16 %v351, %v350
    %v353 = vld [vmem:[#allocation7] sm:$0xf]
    %v354 = vld [vmem:[#allocation7 + $0x4] sm:$0xf]
    %v355 = vld [vmem:[#allocation7 + $0x8] sm:$0xf]
    %v356 = vld [vmem:[#allocation7 + $0xc] sm:$0xf]
    %v357 = vld [vmem:[#allocation7 + $0x10] sm:$0xf]
    %v358 = vld [vmem:[#allocation7 + $0x14] sm:$0xf]
    %v359 = vld [vmem:[#allocation7 + $0x18] sm:$0xf]
    %v360 = vld [vmem:[#allocation7 + $0x1c] sm:$0xf]
    %v361 = vld [vmem:[#allocation7 + $0x20] sm:$0xf]
    %v362 = vld [vmem:[#allocation7 + $0x24] sm:$0xf]
    %v363 = vld [vmem:[#allocation7 + $0x28] sm:$0xf]
    %v364 = vld [vmem:[#allocation7 + $0x2c] sm:$0xf]
    %v365 = vld [vmem:[#allocation7 + $0x30] sm:$0xf]
    %v366 = vld [vmem:[#allocation7 + $0x34] sm:$0xf]
    %v367 = vld [vmem:[#allocation7 + $0x38] sm:$0xf]
    %v368 = vld [vmem:[#allocation7 + $0x3c] sm:$0xf]
    %v369 = vld [vmem:[%s8] sm:$0x1]
    %v371 = vperm.slane %v369, 0
    %v389 = vunpack.c.l.b16 %v353
    %v390 = vunpack.c.l.b16 %v354
    %v391 = vunpack.c.l.b16 %v355
    %v392 = vunpack.c.l.b16 %v356
    %v393 = vunpack.c.l.b16 %v357
    %v394 = vunpack.c.l.b16 %v358
    %v395 = vunpack.c.l.b16 %v359
    %v396 = vunpack.c.l.b16 %v360
    %v397 = vunpack.c.l.b16 %v361
    %v398 = vunpack.c.l.b16 %v362
    %v399 = vunpack.c.l.b16 %v363
    %v400 = vunpack.c.l.b16 %v364
    %v401 = vunpack.c.l.b16 %v365
    %v402 = vunpack.c.l.b16 %v366
    %v403 = vunpack.c.l.b16 %v367
    %v404 = vunpack.c.l.b16 %v368
    %v405 = vpack.c.b16 %v390, %v389
    %v406 = vpack.c.b16 %v392, %v391
    %v407 = vpack.c.b16 %v394, %v393
    %v408 = vpack.c.b16 %v396, %v395
    %v409 = vpack.c.b16 %v398, %v397
    %v410 = vpack.c.b16 %v400, %v399
    %v411 = vpack.c.b16 %v402, %v401
    %v412 = vpack.c.b16 %v404, %v403
    %421 = vmatpush.bf16.msra.mxu0 %v412
    %422 = vmatpush.bf16.msra.mxu0 %v411
    %423 = vmatpush.bf16.msra.mxu0 %v410
    %424 = vmatpush.bf16.msra.mxu0 %v409
    %425 = vmatpush.bf16.msra.mxu0 %v408
    %426 = vmatpush.bf16.msra.mxu0 %v407
    %427 = vmatpush.bf16.msra.mxu0 %v406
    %428 = vmatpush.bf16.msra.mxu0 %v405
    %429 = vmatmul.bf16.gmra.mxu0 %v352
    %v430 = vpop.f32.mrf.mxu0
    %v431 = vadd.f32 %v371, %v430
    %v432 = vpop.f32.mrf.mxu0
    %v433 = vadd.f32 %v371, %v432
    %434 = vdwg.mxu0
    %v435 = vxor.u32 %v431, 2147483648
    %v436 = vxor.u32 %v433, 2147483648
    %v437 = vmul.f32 %v435, 1.442695
    %v438 = vpow.pop %v437
    %v439 = vmul.f32 %v436, 1.442695
    %v440 = vpow.pop %v439
    %v441 = vadd.f32 %v438, 1.0
    %v442 = vadd.f32 %v440, 1.0
    %v443 = vrcp.pop %v441
    %v444 = vmul.f32 %v441, %v443
    %v445 = vsub.f32 1.0, %v444
    %v446 = vmul.f32 %v443, %v445
    %v447 = vadd.f32 %v443, %v446
    %vm448 = vweird.f32 %v441
    %vm449 = vweird.f32 %v443
    %vm450 = vmor %vm448, %vm449
    %v451 = vsel %vm450, %v443, %v447
    %v452 = vand.u32 2147483647, %v441
    %vm453 = vcmp.eq.f32.partialorder %v452, 8.507059e+37
    %v454 = vand.u32 %v441, 2147483648
    %v455 = vor.u32 1.1754944e-38, %v454
    %v456 = vsel %vm453, %v455, %v451
    %v457 = vmul.f32 1.0, %v456
    %v458 = vrcp.pop %v442
    %v459 = vmul.f32 %v442, %v458
    %v460 = vsub.f32 1.0, %v459
    %v461 = vmul.f32 %v458, %v460
    %v462 = vadd.f32 %v458, %v461
    %vm463 = vweird.f32 %v442
    %vm464 = vweird.f32 %v458
    %vm465 = vmor %vm463, %vm464
    %v466 = vsel %vm465, %v458, %v462
    %v467 = vand.u32 2147483647, %v442
    %vm468 = vcmp.eq.f32.partialorder %v467, 8.507059e+37
    %v469 = vand.u32 %v442, 2147483648
    %v470 = vor.u32 1.1754944e-38, %v469
    %v471 = vsel %vm468, %v470, %v466
    %v472 = vmul.f32 1.0, %v471
    %473 = vst [vmem:[%s9] sm:$0xff] %v457
    %474 = vst [vmem:[%s9 + $0x8] sm:$0xff] %v472
    // Predicated region
    $region54: #{_autoencoder_run.1} parent=1 // pred_check
      _
    $region55: #{_autoencoder_run.1} parent=1 // pred_check_branch
      %476 = sbr.rel (0) target = $region57
    $region56: #{_autoencoder_run.1} parent=1 // pred_region
      _
    $region57: #{_autoencoder_run.1} parent=1 // pred_fallthru
      _
    // Predicated region
    $region58: #{_autoencoder_run.1} parent=1 // pred_check
      _
    $region59: #{_autoencoder_run.1} parent=1 // pred_check_branch
      %478 = sbr.rel (0) target = $region61
    $region60: #{_autoencoder_run.1} parent=1 // pred_region
      _
    $region61: #{_autoencoder_run.1} parent=1 // pred_fallthru
      _
    %479 = vsyncpa [#allocation3], 1
    %480 = vsyncpa [#allocation5], 1
    %481 = vsyncpa [#allocation8], 1

</llo_original>
